<compile_context>
chip_gen: v7x
topology: tpu7x:2x2x1
jax: 0.10.0
libtpu: 0.0.40
codegen_flags: <defaults>
</compile_context>

<pallas_src>
import functools
import math

import jax
import jax.numpy as jnp
from jax import lax
from jax.experimental import pallas as pl
from jax.experimental.pallas import tpu as pltpu


_GOLDEN = 0x9E3779B9   # seed-mixing constant
_MUL1 = 0x7FEB352D     # lowbias32 constants
_MUL2 = 0x846CA68B


def _hash_u32(x):
    """lowbias32 integer hash (uint32 -> uint32); pure VPU-friendly ops."""
    x = x ^ (x >> 16)
    x = x * jnp.uint32(_MUL1)
    x = x ^ (x >> 15)
    x = x * jnp.uint32(_MUL2)
    x = x ^ (x >> 16)
    return x


def _keep_mask(lin_idx_i32, seed_u32, p):
    """Deterministic keep mask with P(drop) ~= p, keyed on global element index."""
    key = (seed_u32 + jnp.uint32(1)) * jnp.uint32(_GOLDEN)
    h = _hash_u32(lin_idx_i32.astype(jnp.uint32) ^ key)
    # Compare in signed 31-bit space (avoids unsigned-compare lowering issues).
    hi = (h >> 1).astype(jnp.int32)                       # uniform in [0, 2^31)
    thr = min(int(p * float(2 ** 31)), 2 ** 31 - 1)
    return hi >= jnp.int32(thr)


def _pe_add_dropout_kernel(seed_ref, x_ref, pe_ref, o_ref, *, p, n_per_batch):
    """One grid step: x_ref / pe_ref / o_ref are (tR, L) lane-dense tiles."""
    r_tile = pl.program_id(0)
    b = pl.program_id(1)

    y = x_ref[...] + pe_ref[...]          # positional encoding, broadcast over batch

    if p >= 1.0:
        y = jnp.zeros_like(y)
    elif p > 0.0:
        tR, L = x_ref.shape
        row = lax.broadcasted_iota(jnp.int32, (tR, L), 0)
        col = lax.broadcasted_iota(jnp.int32, (tR, L), 1)
        # Global element index == b*S*D + s*D + d, independent of tiling/layout.
        lin = b * n_per_batch + (r_tile * tR + row) * L + col
        keep = _keep_mask(lin, seed_ref[0].astype(jnp.uint32), p)
        scale = jnp.float32(1.0 / (1.0 - p))
        y = jnp.where(keep, y * scale, jnp.zeros_like(y))

    o_ref[...] = y.astype(o_ref.dtype)


def make_positional_encoding_table(d_model, max_len=20000, dtype=jnp.float32):
    """Exactly mirrors the PyTorch __init__ buffer construction."""
    position = jnp.arange(0, max_len, dtype=jnp.float32)[:, None]           # (L, 1)
    div_term = jnp.exp(
        jnp.arange(0, d_model, 2, dtype=jnp.float32)
        * (-math.log(10000.0) / d_model))                                   # (D/2,)
    ang = position * div_term                                               # (L, D/2)
    pe = jnp.zeros((max_len, d_model), dtype=jnp.float32)
    pe = pe.at[:, 0::2].set(jnp.sin(ang))
    pe = pe.at[:, 1::2].set(jnp.cos(ang))
    return pe.astype(dtype)                                                 # (L, D)


def _canonical_layout(S, D):
    """Pick a lane-dense 2D (rows, lanes) view of the per-batch (S, D) plane."""
    if D % 128 == 0:
        return S, D                     # already lane-dense, widest last dim
    if (S * D) % 128 == 0:
        return (S * D) // 128, 128      # repack so stores are full-width
    return S, D                         # fallback: correct but lane-sparse


def _choose_row_tile(R, L, itemsize, target_bytes=2 * 1024 * 1024):
    """Largest ~2 MiB row tile; multiple of 8 rows (or the full row count)."""
    max_rows = max(1, target_bytes // (L * itemsize))
    if R <= max_rows:
        return R
    return max((max_rows // 8) * 8, 8)


def positional_encoding(x, pe_table, *, dropout_p=0.1, seed=0):
    """x: (B, S, D). Returns dropout(x + pe[:S]) like the nn.Module forward
    (train mode); dropout_p=0.0 gives the eval-mode result."""
    B, S, D = x.shape
    itemsize = jnp.dtype(x.dtype).itemsize
    pe_slice = pe_table[:S, :].astype(x.dtype)           # glue: buffer slice

    R, L = _canonical_layout(S, D)
    x_c = x.reshape(B, R, L)
    pe_c = pe_slice.reshape(R, L)

    tR = _choose_row_tile(R, L, itemsize)
    grid = (pl.cdiv(R, tR), B)                           # pe index constant on inner axis

    seed_arr = jnp.array([seed], dtype=jnp.int32)
    kernel = functools.partial(_pe_add_dropout_kernel,
                               p=float(dropout_p), n_per_batch=R * L)

    grid_spec = pltpu.PrefetchScalarGridSpec(
        num_scalar_prefetch=1,                           # seed -> SMEM
        grid=grid,
        in_specs=[
            pl.BlockSpec((None, tR, L), lambda r, b, seed: (b, r, 0)),   # x tile
            pl.BlockSpec((tR, L), lambda r, b, seed: (r, 0)),            # pe tile (resident over b)
        ],
        out_specs=pl.BlockSpec((None, tR, L), lambda r, b, seed: (b, r, 0)),
    )

    n_elems = B * S * D
    cost = pl.CostEstimate(
        flops=10 * n_elems,                              # add + hash/mask filler
        transcendentals=0,
        bytes_accessed=(2 * n_elems + S * D) * itemsize)

    out = pl.pallas_call(
        kernel,
        out_shape=jax.ShapeDtypeStruct((B, R, L), x.dtype),
        grid_spec=grid_spec,
        compiler_params=pltpu.CompilerParams(
            dimension_semantics=("parallel", "parallel"),
            vmem_limit_bytes=32 * 1024 * 1024),
        cost_estimate=cost,
    )(seed_arr, x_c, pe_c)

    return out.reshape(B, S, D)


def positional_encoding_reference(x, pe_table, *, dropout_p=0.1, seed=0):
    """Pure-JAX reference using the same deterministic mask."""
    B, S, D = x.shape
    y = x + pe_table[None, :S, :].astype(x.dtype)
    p = float(dropout_p)
    if p >= 1.0:
        return jnp.zeros_like(y)
    if p > 0.0:
        lin = jnp.arange(B * S * D, dtype=jnp.int32).reshape(B, S, D)
        keep = _keep_mask(lin, jnp.uint32(seed), p)
        y = jnp.where(keep, y * jnp.float32(1.0 / (1.0 - p)), jnp.zeros_like(y))
    return y


if __name__ == "__main__":
    B, S, D = 2, 8, 32
    key = jax.random.PRNGKey(0)
    x = jax.random.normal(key, (B, S, D), dtype=jnp.float32)

    pe_table = make_positional_encoding_table(d_model=D, max_len=20000)

    # Train-mode forward: dropout(x + pe[:S])
    out = positional_encoding(x, pe_table, dropout_p=0.1, seed=0)
    out = jax.block_until_ready(out)
    assert out.shape == (B, S, D)

    ref = positional_encoding_reference(x, pe_table, dropout_p=0.1, seed=0)
    assert bool(jnp.allclose(out, ref, atol=1e-5, rtol=1e-5))

    # Eval-mode equivalent (p=0) must equal x + pe exactly.
    out0 = jax.block_until_ready(positional_encoding(x, pe_table, dropout_p=0.0))
    assert bool(jnp.allclose(out0, x + pe_table[None, :S, :], atol=1e-5))

    # Dropout drops roughly p of the elements and rescales the rest.
    frac_kept = float(jnp.mean((out != 0.0).astype(jnp.float32)))
    assert 0.6 < frac_kept < 1.0

    print("KERNEL_OK")
</pallas_src>

<mosaic_0001>
module attributes {stable_mosaic.version = 11 : i64} {
  func.func @_pe_add_dropout_kernel(%arg0: i32, %arg1: i32, %arg2: memref<1xi32, #tpu.memory_space<smem>>, %arg3: memref<1x2x128xf32, #tpu.memory_space<vmem>>, %arg4: memref<2x128xf32, #tpu.memory_space<vmem>>, %arg5: memref<1x2x128xf32, #tpu.memory_space<vmem>>) attributes {dimension_semantics = [#tpu.dimension_semantics<parallel>, #tpu.dimension_semantics<parallel>], iteration_bounds = array<i64: 1, 2>, scalar_prefetch = 1 : i64, scratch_operands = 0 : i64, tpu.core_type = #tpu.core_type<tc>, window_params = [{transform_indices = @transform_0, window_bounds = array<i64: 1, 2, 128>}, {transform_indices = @transform_1, window_bounds = array<i64: 2, 128>}, {transform_indices = @transform_2, window_bounds = array<i64: 1, 2, 128>}]} {
    %c0 = arith.constant 0 : index
    %c0_0 = arith.constant 0 : index
    %c0_1 = arith.constant 0 : index
    %0 = vector.load %arg3[%c0, %c0_0, %c0_1] : memref<1x2x128xf32, #tpu.memory_space<vmem>>, vector<1x2x128xf32>
    %1 = vector.shape_cast %0 : vector<1x2x128xf32> to vector<2x128xf32>
    %c0_2 = arith.constant 0 : index
    %c0_3 = arith.constant 0 : index
    %2 = vector.load %arg4[%c0_2, %c0_3] : memref<2x128xf32, #tpu.memory_space<vmem>>, vector<2x128xf32>
    %3 = arith.addf %1, %2 : vector<2x128xf32>
    %4 = tpu.iota {dimensions = array<i32: 0>} : vector<2x128xi32>
    %5 = tpu.iota {dimensions = array<i32: 1>} : vector<2x128xi32>
    %c256_i32 = arith.constant 256 : i32
    %6 = arith.muli %arg1, %c256_i32 : i32
    %c2_i32 = arith.constant 2 : i32
    %7 = arith.muli %arg0, %c2_i32 : i32
    %8 = vector.broadcast %7 : i32 to vector<2x128xi32>
    %9 = arith.addi %8, %4 : vector<2x128xi32>
    %c128_i32 = arith.constant 128 : i32
    %10 = vector.broadcast %c128_i32 : i32 to vector<2x128xi32>
    %11 = arith.muli %9, %10 : vector<2x128xi32>
    %12 = vector.broadcast %6 : i32 to vector<2x128xi32>
    %13 = arith.addi %12, %11 : vector<2x128xi32>
    %14 = arith.addi %13, %5 : vector<2x128xi32>
    %c0_4 = arith.constant 0 : index
    %15 = memref.load %arg2[%c0_4] : memref<1xi32, #tpu.memory_space<smem>>
    %c1_i32 = arith.constant 1 : i32
    %16 = arith.addi %15, %c1_i32 : i32
    %c-1640531527_i32 = arith.constant -1640531527 : i32
    %17 = arith.muli %16, %c-1640531527_i32 : i32
    %18 = vector.broadcast %17 : i32 to vector<2x128xi32>
    %19 = arith.xori %14, %18 : vector<2x128xi32>
    %c16_i32 = arith.constant 16 : i32
    %20 = vector.broadcast %c16_i32 : i32 to vector<2x128xi32>
    %21 = arith.shrui %19, %20 : vector<2x128xi32>
    %22 = arith.xori %19, %21 : vector<2x128xi32>
    %c2146121005_i32 = arith.constant 2146121005 : i32
    %23 = vector.broadcast %c2146121005_i32 : i32 to vector<2x128xi32>
    %24 = arith.muli %22, %23 : vector<2x128xi32>
    %c15_i32 = arith.constant 15 : i32
    %25 = vector.broadcast %c15_i32 : i32 to vector<2x128xi32>
    %26 = arith.shrui %24, %25 : vector<2x128xi32>
    %27 = arith.xori %24, %26 : vector<2x128xi32>
    %c-2073254261_i32 = arith.constant -2073254261 : i32
    %28 = vector.broadcast %c-2073254261_i32 : i32 to vector<2x128xi32>
    %29 = arith.muli %27, %28 : vector<2x128xi32>
    %c16_i32_5 = arith.constant 16 : i32
    %30 = vector.broadcast %c16_i32_5 : i32 to vector<2x128xi32>
    %31 = arith.shrui %29, %30 : vector<2x128xi32>
    %32 = arith.xori %29, %31 : vector<2x128xi32>
    %c1_i32_6 = arith.constant 1 : i32
    %33 = vector.broadcast %c1_i32_6 : i32 to vector<2x128xi32>
    %34 = arith.shrui %32, %33 : vector<2x128xi32>
    %c214748364_i32 = arith.constant 214748364 : i32
    %35 = vector.broadcast %c214748364_i32 : i32 to vector<2x128xi32>
    %36 = arith.cmpi sge, %34, %35 : vector<2x128xi32>
    %cst = arith.constant 1.11111116 : f32
    %37 = vector.broadcast %cst : f32 to vector<2x128xf32>
    %38 = arith.mulf %3, %37 : vector<2x128xf32>
    %cst_7 = arith.constant 0.000000e+00 : f32
    %39 = vector.broadcast %cst_7 : f32 to vector<2x128xf32>
    %40 = arith.select %36, %38, %39 : vector<2x128xi1>, vector<2x128xf32>
    %c0_8 = arith.constant 0 : index
    %c0_9 = arith.constant 0 : index
    %c0_10 = arith.constant 0 : index
    %41 = vector.load %arg5[%c0_8, %c0_9, %c0_10] : memref<1x2x128xf32, #tpu.memory_space<vmem>>, vector<1x2x128xf32>
    %42 = vector.shape_cast %41 : vector<1x2x128xf32> to vector<2x128xf32>
    %43 = vector.shape_cast %40 : vector<2x128xf32> to vector<1x2x128xf32>
    tpu.vector_store %arg5[%c0_8, %c0_9, %c0_10], %43 {strides = array<i32>} : memref<1x2x128xf32, #tpu.memory_space<vmem>>, vector<1x2x128xf32>,
    return
  }
  func.func @transform_0(%arg0: i32, %arg1: i32, %arg2: memref<1xi32, #tpu.memory_space<smem>>) -> (i32, i32, i32) {
    %c0_i32 = arith.constant 0 : i32
    %c0_i32_0 = arith.constant 0 : i32
    return %arg1, %arg0, %c0_i32 : i32, i32, i32
  }
  func.func @transform_1(%arg0: i32, %arg1: i32, %arg2: memref<1xi32, #tpu.memory_space<smem>>) -> (i32, i32) {
    %c0_i32 = arith.constant 0 : i32
    %c0_i32_0 = arith.constant 0 : i32
    return %arg0, %c0_i32 : i32, i32
  }
  func.func @transform_2(%arg0: i32, %arg1: i32, %arg2: memref<1xi32, #tpu.memory_space<smem>>) -> (i32, i32, i32) {
    %c0_i32 = arith.constant 0 : i32
    %c0_i32_0 = arith.constant 0 : i32
    return %arg1, %arg0, %c0_i32 : i32, i32, i32
  }
}

</mosaic_0001>

<llo_original>
// kernel: tpu_custom_call.1
$region0: #{tpu_custom_call.1}
  #allocation0 [shape = 'u32[]', space=smem, size = 0x4, offset = 0x4, fixed_abs, tag = 'smem constant byte address 0x4 - core index']
  #allocation1 [shape = 'u32[144,128]{1,0:T(1,128)}', space=vmem, size = 0x12000, scoped, tag = 'internal scratch']
  #allocation2 [shape = 's32[1]{0}', space=sflag, size = 0x4, scoped, tag = 'scoped memory for tpu_custom_call.1']
  #allocation3 [shape = 's32[1]{0:T(128)S(6)}', space=smem, size = 0x200, scoped, tag = 'prefetched SMEM operand 0']
  %s0 = inlined_call_operand.<no memory space> [shape: s32[1], index: 0, kind: input, shape index: {}]
  %s1 = inlined_call_operand.hbm [shape: f32[2,2,128], index: 1, kind: input, shape index: {}]
  %s2 = inlined_call_operand.vmem [shape: f32[2,128], index: 2, kind: input, shape index: {}]
  %s3 = inlined_call_operand.hbm [shape: f32[2,2,128], index: 3, kind: output, shape index: {}]
  %s4 = sld [smem:[#allocation0]]
  $region45: #{tpu_custom_call.1} parent=0
    _
  %s6 = ssub.s32 1, %s4
  %s7 = scalar_select 0, %s6, %s4
  %8 = sst [smem:[#allocation3]] %s0
  $region1: #{tpu_custom_call.1} parent=0
    #allocation4 [shape = 'u8[2048]{0}', space=vmem, size = 0x800, scoped, tag = 'input window, operand 1']
    #allocation5 [shape = 's32[2]{0}', space=sflag, size = 0x8, scoped, tag = 'scoped memory for tpu_custom_call.1']
    #allocation6 [shape = 's32[2]{0}', space=sflag, size = 0x8, scoped, tag = 'scoped memory for tpu_custom_call.1']
    #allocation7 [shape = 'u8[2048]{0}', space=vmem, size = 0x800, scoped, tag = 'output window, operand 0']
    %9 = vsyncpa [#allocation5], 0
    %s10 = scalar_lea.sflag [#allocation5], 1
    %11 = vsyncpa %s10, 0
    %12 = vsyncpa [#allocation6], 0
    %s13 = scalar_lea.sflag [#allocation6], 1
    %14 = vsyncpa %s13, 0
    loop: start=0, step=1, limit=4
    $region2: #{tpu_custom_call.1} parent=1 // loop_pre_header
      _
    $region3: #{tpu_custom_call.1} parent=1 // loop_header
      %s16 = sphi 0, %s20
      %p17 = scmp.ge.s32.totalorder %s16, 4
      %s23 = sphi 0, %s35
      %s24 = sphi 0, %s31
      %s25 = sphi 0, %s23
      %s26 = sphi 0, %s24
      %s27 = sphi 0, %s25
      %s28 = sphi 0, %s26
      %s40 = sphi 0, %s42
      %s43 = sphi 0, %s40
      %s44 = sphi 0, %s43
      %s60 = sphi 0, %s44
      %s66 = sphi 0, %s68
      %s69 = sphi 0, %s66
      %s70 = sphi 0, %s69
      %s86 = sphi 0, %s70
      %s94 = sphi 0, %s96
      %s97 = sphi 0, %s94
      %s98 = sphi 0, %s97
      %s114 = sphi 0, %s98
    $region4: #{tpu_custom_call.1} parent=1 // loop_header_branch
      %19 = sbr.rel (%p17) target = $region8
    $region5: #{tpu_custom_call.1} parent=1 // loop_body
      %s21 = ssub.s32 %s16, 1
      %s22 = ssub.s32 %s16, 2
      %s29 = sadd.s32 1, %s24
      %p30 = scmp.ge.s32.totalorder %s29, 2
      %s31 = scalar_select %p30, 0, %s29
      %s32 = sadd.s32 1, %s23
      %s33 = scalar_select %p30, %s32, %s23
      %p34 = scmp.ge.s32.totalorder %s33, 1
      %s35 = scalar_select %p34, 0, %s33
      %s36 = ssub.s32 %s24, %s31
      %s37 = ssub.s32 %s23, %s35
      %s38 = sor.u32 %s36, %s37
      %p39 = scmp.eq.s32.totalorder %s38, 0
      %s41 = sadd.s32 %s40, 1
      %s42 = scalar_select %p39, %s40, %s41
      %p45 = pneg %p39
      %p46 = scmp.eq.s32.totalorder %s16, 1
      %p47 = por %p45, %p46
      %p48 = scmp.ne.s32.totalorder %s40, %s43
      %p49 = scmp.eq.s32.totalorder %s16, 0
      %p50 = por %p48, %p49
      %p51 = scmp.ne.s32.totalorder %s40, %s43
      %p52 = scmp.eq.s32.totalorder %s21, 1
      %p53 = por %p51, %p52
      %p54 = scmp.ne.s32.totalorder %s43, %s44
      %p55 = scmp.eq.s32.totalorder %s21, 0
      %p56 = por %p54, %p55
      %p57 = scmp.ne.s32.totalorder %s43, %s44
      %p58 = scmp.eq.s32.totalorder %s22, 1
      %p59 = por %p57, %p58
      %p61 = scmp.ne.s32.totalorder %s44, %s60
      %p62 = scmp.eq.s32.totalorder %s22, 0
      %p63 = por %p61, %p62
      %s64 = ssub.s32 %s23, %s35
      %p65 = scmp.eq.s32.totalorder %s64, 0
      %s67 = sadd.s32 %s66, 1
      %s68 = scalar_select %p65, %s66, %s67
      %p71 = pneg %p65
      %p72 = scmp.eq.s32.totalorder %s16, 1
      %p73 = por %p71, %p72
      %p74 = scmp.ne.s32.totalorder %s66, %s69
      %p75 = scmp.eq.s32.totalorder %s16, 0
      %p76 = por %p74, %p75
      %p77 = scmp.ne.s32.totalorder %s66, %s69
      %p78 = scmp.eq.s32.totalorder %s21, 1
      %p79 = por %p77, %p78
      %p80 = scmp.ne.s32.totalorder %s69, %s70
      %p81 = scmp.eq.s32.totalorder %s21, 0
      %p82 = por %p80, %p81
      %p83 = scmp.ne.s32.totalorder %s69, %s70
      %p84 = scmp.eq.s32.totalorder %s22, 1
      %p85 = por %p83, %p84
      %p87 = scmp.ne.s32.totalorder %s70, %s86
      %p88 = scmp.eq.s32.totalorder %s22, 0
      %p89 = por %p87, %p88
      %s90 = ssub.s32 %s24, %s31
      %s91 = ssub.s32 %s23, %s35
      %s92 = sor.u32 %s90, %s91
      %p93 = scmp.eq.s32.totalorder %s92, 0
      %s95 = sadd.s32 %s94, 1
      %s96 = scalar_select %p93, %s94, %s95
      %p99 = pneg %p93
      %p100 = scmp.eq.s32.totalorder %s16, 1
      %p101 = por %p99, %p100
      %p102 = scmp.ne.s32.totalorder %s94, %s97
      %p103 = scmp.eq.s32.totalorder %s16, 0
      %p104 = por %p102, %p103
      %p105 = scmp.ne.s32.totalorder %s94, %s97
      %p106 = scmp.eq.s32.totalorder %s21, 1
      %p107 = por %p105, %p106
      %p108 = scmp.ne.s32.totalorder %s97, %s98
      %p109 = scmp.eq.s32.totalorder %s21, 0
      %p110 = por %p108, %p109
      %p111 = scmp.ne.s32.totalorder %s97, %s98
      %p112 = scmp.eq.s32.totalorder %s22, 1
      %p113 = por %p111, %p112
      %p115 = scmp.ne.s32.totalorder %s98, %s114
      %p116 = scmp.eq.s32.totalorder %s22, 0
      %p117 = por %p115, %p116
      %p118 = scmp.le.s32.totalorder 1, %s16
      %p119 = scmp.lt.s32.totalorder %s16, 3
      %p120 = pnand %p118, %p119
      %p121 = pneg %p120
      // Predicated region
      $region9: #{tpu_custom_call.1} parent=5 // pred_check
        _
      $region10: #{tpu_custom_call.1} parent=5 // pred_check_branch
        %123 = sbr.rel (%p120) target = $region12
      $region11: #{tpu_custom_call.1} parent=5 // pred_region
        %s124 = ssub.s32 %s16, 1
        // Predicated region
        $region13: #{tpu_custom_call.1} parent=11 // pred_check
          %p125 = pneg %p82
        $region14: #{tpu_custom_call.1} parent=11 // pred_check_branch
          %127 = sbr.rel (%p125) target = $region16
        $region15: #{tpu_custom_call.1} parent=11 // pred_region
          %p128 = scmp.lt.s32.totalorder %s25, 0
          %s129 = scalar_select %p128, %s25, 0
          %s130 = smul.addr %s129, 2
          %s131 = scalar_lea.vmem %s2, %s130
        $region16: #{tpu_custom_call.1} parent=11 // pred_fallthru
          _
      $region12: #{tpu_custom_call.1} parent=5 // pred_fallthru
        _
      %p132 = scmp.lt.s32.totalorder %s16, 2
      // Predicated region
      $region17: #{tpu_custom_call.1} parent=5 // pred_check
        %p133 = pneg %p132
      $region18: #{tpu_custom_call.1} parent=5 // pred_check_branch
        %135 = sbr.rel (%p133) target = $region20
      $region19: #{tpu_custom_call.1} parent=5 // pred_region
        // Predicated region
        $region21: #{tpu_custom_call.1} parent=19 // pred_check
          %p136 = pneg %p50
        $region22: #{tpu_custom_call.1} parent=19 // pred_check_branch
          %138 = sbr.rel (%p136) target = $region24
        $region23: #{tpu_custom_call.1} parent=19 // pred_region
          %s139 = sand.u32 %s40, 1
          %s140 = scalar_lea.sflag [#allocation5], %s139
          %s141 = sand.u32 %s40, 1
          %s142 = smul.addr %s141, 2
          %s143 = scalar_lea.vmem [#allocation4], %s142
          %s145 = ssub.s32 32, 32
          %146 = vsyncadd %s140, %s145
          %s147 = sadd.s32 %s23, %s24
          %s148 = smul.addr %s147, 32
          %s149 = scalar_lea.hbm %s1, %s148
          %s151 = sshll.u32 %s143, 4
          %s152 = int_to_ptr.vmem [resolvable:$true] %s151
          %154 = dma.hbm_to_vmem [thread:$0]  %s149, 32, %s152, %s140
        $region24: #{tpu_custom_call.1} parent=19 // pred_fallthru
          _
      $region20: #{tpu_custom_call.1} parent=5 // pred_fallthru
        _
      %p155 = scmp.le.s32.totalorder 1, %s16
      %p156 = scmp.lt.s32.totalorder %s16, 3
      %p157 = pnand %p155, %p156
      %p158 = pneg %p157
      // Predicated region
      $region25: #{tpu_custom_call.1} parent=5 // pred_check
        _
      $region26: #{tpu_custom_call.1} parent=5 // pred_check_branch
        %160 = sbr.rel (%p157) target = $region28
      $region27: #{tpu_custom_call.1} parent=5 // pred_region
        %s161 = ssub.s32 %s16, 1
        %s162 = sand.u32 %s43, 1
        %s163 = scalar_lea.sflag [#allocation5], %s162
        %s164 = sand.u32 %s43, 1
        %s165 = smul.addr %s164, 2
        %s166 = scalar_lea.vmem [#allocation4], %s165
        // Predicated region
        $region29: #{tpu_custom_call.1} parent=27 // pred_check
          %p167 = pneg %p56
        $region30: #{tpu_custom_call.1} parent=27 // pred_check_branch
          %169 = sbr.rel (%p167) target = $region32
        $region31: #{tpu_custom_call.1} parent=27 // pred_region
          %170 = dma.done %s163, 32
        $region32: #{tpu_custom_call.1} parent=27 // pred_fallthru
          _
        %s171 = sand.u32 %s43, 1
        %s172 = scalar_lea.sflag [#allocation5], %s171
        %s173 = sand.u32 %s43, 1
        %s174 = smul.addr %s173, 2
        %s175 = scalar_lea.vmem [#allocation4], %s174
        %p176 = pneg %p56
        %p177 = pneg %p53
        %p178 = scmp.lt.s32.totalorder %s25, 0
        %s179 = scalar_select %p178, %s25, 0
        %s180 = smul.addr %s179, 2
        %s181 = scalar_lea.vmem %s2, %s180
        %p182 = pneg %p82
        %p183 = pneg %p79
        %p184 = pneg %p110
        %p185 = pneg %p107
        %s186 = sand.u32 %s97, 1
        %s187 = scalar_lea.sflag [#allocation6], %s186
        %s188 = sand.u32 %s97, 1
        %s189 = smul.addr %s188, 2
        %s190 = scalar_lea.vmem [#allocation7], %s189
        %p191 = scmp.lt.s32.totalorder %s25, 0
        %s192 = scalar_select %p191, %s25, 0
        %s193 = smul.addr %s192, 2
        %s194 = scalar_lea.vmem %s2, %s193
        %v195 = vld [vmem:[%s166] sm:$0x3]
        %v196 = vld [vmem:[%s194] sm:$0x3]
        %v197 = vadd.f32 %v195, %v196
        %v198 = vlaneseq
        %v199 = vshrl.u32 %v198, 7
        %v200 = vlaneseq
        %v201 = vand.u32 %v200, 127
        %s202 = smul.u32 %s26, 256
        %s203 = smul.u32 %s25, 2
        %v204 = vstv %s203
        %v205 = vadd.s32 %v204, %v199
        %v206 = vmul.u32 %v205, 128
        %v207 = vstv %s202
        %v208 = vadd.s32 %v207, %v206
        %v209 = vadd.s32 %v208, %v201
        %s210 = sld [smem:[#allocation3]]
        %s211 = sadd.s32 %s210, 1
        %s212 = smul.u32 %s211, 2654435769
        %v213 = vstv %s212
        %v214 = vxor.u32 %v209, %v213
        %v215 = vshrl.u32 %v214, 16
        %v216 = vxor.u32 %v214, %v215
        %v217 = vmul.u32 %v216, 2146121005
        %v218 = vshrl.u32 %v217, 15
        %v219 = vxor.u32 %v217, %v218
        %v220 = vmul.u32 %v219, 2221713035
        %v221 = vshrl.u32 %v220, 16
        %v222 = vxor.u32 %v220, %v221
        %v223 = vshrl.u32 %v222, 1
        %vm224 = vcmp.ge.s32.totalorder %v223, 214748364
        %v225 = vmul.f32 %v197, 1.1111112
        %v226 = vsel %vm224, %v225, 0.0
        %227 = vst [vmem:[%s190] sm:$0x3] %v226
        %s228 = sand.u32 %s97, 1
        %s229 = scalar_lea.sflag [#allocation6], %s228
        %s230 = sand.u32 %s97, 1
        %s231 = smul.addr %s230, 2
        %s232 = scalar_lea.vmem [#allocation7], %s231
        // Predicated region
        $region33: #{tpu_custom_call.1} parent=27 // pred_check
          %p233 = pneg %p107
        $region34: #{tpu_custom_call.1} parent=27 // pred_check_branch
          %235 = sbr.rel (%p233) target = $region36
        $region35: #{tpu_custom_call.1} parent=27 // pred_region
          %s237 = ssub.s32 32, 32
          %238 = vsyncadd %s229, %s237
          %s239 = sadd.s32 %s25, %s26
          %s240 = smul.addr %s239, 32
          %s241 = scalar_lea.hbm %s3, %s240
          %s243 = sshll.u32 %s232, 4
          %s244 = int_to_ptr.vmem [resolvable:$true] %s243
          %246 = dma.vmem_to_hbm [thread:$0]  %s244, 32, %s241, %s229
        $region36: #{tpu_custom_call.1} parent=27 // pred_fallthru
          _
      $region28: #{tpu_custom_call.1} parent=5 // pred_fallthru
        _
      %p247 = scmp.le.s32.totalorder 2, %s16
      // Predicated region
      $region37: #{tpu_custom_call.1} parent=5 // pred_check
        %p248 = pneg %p247
      $region38: #{tpu_custom_call.1} parent=5 // pred_check_branch
        %250 = sbr.rel (%p248) target = $region40
      $region39: #{tpu_custom_call.1} parent=5 // pred_region
        %s251 = ssub.s32 %s16, 2
        // Predicated region
        $region41: #{tpu_custom_call.1} parent=39 // pred_check
          %p252 = pneg %p113
        $region42: #{tpu_custom_call.1} parent=39 // pred_check_branch
          %254 = sbr.rel (%p252) target = $region44
        $region43: #{tpu_custom_call.1} parent=39 // pred_region
          %s255 = sand.u32 %s98, 1
          %s256 = scalar_lea.sflag [#allocation6], %s255
          %s257 = sand.u32 %s98, 1
          %s258 = smul.addr %s257, 2
          %s259 = scalar_lea.vmem [#allocation7], %s258
          %260 = dma.done %s256, 32
        $region44: #{tpu_custom_call.1} parent=39 // pred_fallthru
          _
      $region40: #{tpu_custom_call.1} parent=5 // pred_fallthru
        _
    $region6: #{tpu_custom_call.1} parent=1 // loop_footer
      %s20 = sadd.s32 1, %s16
    $region7: #{tpu_custom_call.1} parent=1 // loop_footer_branch
      %15 = sbr.rel target = $region3
    $region8: #{tpu_custom_call.1} parent=1 // loop_exit
      _
    %261 = vsyncpa [#allocation5], 1
    %s262 = scalar_lea.sflag [#allocation5], 1
    %263 = vsyncpa %s262, 1
    %264 = vsyncpa [#allocation6], 1
    %s265 = scalar_lea.sflag [#allocation6], 1
    %266 = vsyncpa %s265, 1

</llo_original>
